<compile_context>
chip_gen: v5e
topology: v5e:2x2
jax: 0.10.0
libtpu: 0.0.40
codegen_flags: <defaults>
</compile_context>

<pallas_src>
import functools

import jax
import jax.numpy as jnp
from jax.experimental import pallas as pl
from jax.experimental.pallas import tpu as pltpu


OUT_PAD = 128  # lane-dense width of the final output slab


# ----------------------------------------------------------------------------
# Fused 2-layer GAT kernel. Matches torch_geometric GATConv defaults:
# concat=True (layer1) / heads=1 (layer2), negative_slope=0.2,
# add_self_loops=True (encoded in adj), bias=True.
# ----------------------------------------------------------------------------
def _fused_gat_kernel(x_ref, w1_ref, att1_ref, b1_ref,
                      w2_ref, att2_ref, b2_ref, bias_ref,
                      out_ref, hfeat_ref,
                      *, heads, c1, out_channels, negative_slope):
    f32 = jnp.float32
    bf16 = jnp.bfloat16
    ns = negative_slope
    n = x_ref.shape[0]

    bias = bias_ref[...]                       # [N, N] bf16 additive mask (0 / -1e30)

    def leaky(v):
        return jnp.maximum(v, ns * v)

    def masked_attention(a_dst_col, a_src_row, src_max, values_bf16, denom_idx):
        # a_dst_col: [N,1] f32, a_src_row: [1,N] f32, src_max: [1,1] f32
        # values_bf16: [N, C] bf16 with a ones column at `denom_idx`.
        raw = a_dst_col + a_src_row                                  # [N, N]
        e = leaky(raw)
        # Monotone upper bound of every row of e (mask bias <= 0) -> stability
        # shift without a per-row [N,N] max reduce.
        m = leaky(a_dst_col + src_max)                               # [N, 1]
        p = jnp.exp(e - m + bias)                                    # masked -> 0
        acc = jnp.dot(p.astype(bf16), values_bf16,
                      preferred_element_type=f32)                    # [N, C]
        # column `denom_idx` of acc is the row-sum of p (softmax denominator)
        inv = pl.reciprocal(acc[:, denom_idx:denom_idx + 1], approx=True)
        return acc * inv

    # ------------- layer 1: GATConv(in, c1, heads=H), concat=True -------------
    xp = jnp.dot(x_ref[...], w1_ref[...], preferred_element_type=f32)   # [N, H*C1]
    xp_bf16 = xp.astype(bf16)
    # All-head logits in one bf16 MXU op against the block-diagonal [H*C1, 2H]
    # attention matrix: cols 0..H-1 -> dst logits, cols H..2H-1 -> src logits.
    logits1 = jnp.dot(xp_bf16, att1_ref[...], preferred_element_type=f32)  # [N, 2H]
    src_logits_t = logits1[:, heads:2 * heads].T                          # [H, N]
    src_max = jnp.max(logits1[:, heads:2 * heads], axis=0, keepdims=True)  # [1, H]
    ones_col = jnp.ones((n, 1), bf16)

    for h in range(heads):
        vals = jnp.concatenate(
            [xp_bf16[:, h * c1:(h + 1) * c1], ones_col], axis=-1)      # [N, C1+1]
        out_h = masked_attention(logits1[:, h:h + 1],
                                 src_logits_t[h:h + 1, :],
                                 src_max[:, h:h + 1],
                                 vals, c1)                             # [N, C1+1]
        hfeat_ref[:, h * c1:(h + 1) * c1] = out_h[:, :c1]

    hfeat = jnp.maximum(hfeat_ref[...] + b1_ref[...], 0.0)             # bias + ReLU
    hfeat_bf16 = hfeat.astype(bf16)                                    # [N, H*C1]

    # ---- layer 2: GATConv(H*C1, out, heads=1), output padded to 128 lanes ----
    xp2 = jnp.dot(hfeat_bf16, w2_ref[...], preferred_element_type=f32)  # [N, OUT_PAD]
    # Inject the softmax-denominator ones column into one of the zero-padded
    # lanes (att2/bias2 rows there are zero, so logits/bias are unaffected).
    col = jax.lax.broadcasted_iota(jnp.int32, xp2.shape, 1)
    xp2 = jnp.where(col == out_channels, 1.0, xp2)
    xp2_bf16 = xp2.astype(bf16)
    logits2 = jnp.dot(xp2_bf16, att2_ref[...], preferred_element_type=f32)  # [N, 2]
    src_max2 = jnp.max(logits2[:, 1:2], axis=0, keepdims=True)              # [1, 1]
    out2 = masked_attention(logits2[:, 0:1], logits2[:, 1:2].T, src_max2,
                            xp2_bf16, out_channels)                         # [N, OUT_PAD]
    out_ref[...] = out2 + b2_ref[...]


# ----------------------------------------------------------------------------
# Wrapper.
# ----------------------------------------------------------------------------
def _block_diag_att(att_dst, att_src):
    """[H, C] attention vectors -> block-diagonal [H*C, 2H] matmul operand."""
    H, C = att_dst.shape
    mat = jnp.zeros((H * C, 2 * H), jnp.float32)
    for h in range(H):
        mat = mat.at[h * C:(h + 1) * C, h].set(att_dst[h])
        mat = mat.at[h * C:(h + 1) * C, H + h].set(att_src[h])
    return mat


def _vmem_limit_bytes(n, in_c, h1c1):
    # Generous estimate of resident VMEM (bf16 mask + score/p tiles + features),
    # clamped to a range that is valid on v5e/v6e (128 MiB) and v7x (64 MiB).
    est = (22 * n * n
           + n * (2 * in_c + 12 * h1c1 + 12 * OUT_PAD + 16)
           + 4 * (in_c * h1c1 + h1c1 * OUT_PAD + 4096))
    est = int(1.5 * est)
    return max(32 * 1024 * 1024, min(est, 48 * 1024 * 1024))


def gat_model_forward(params, x, adj, hidden_channels, out_channels):
    n = x.shape[0]
    heads1 = params["att_src1"].shape[0]
    bf16 = jnp.bfloat16

    # layer-1 attention vectors packed into one block-diagonal matmul operand
    att1 = _block_diag_att(params["att_dst1"], params["att_src1"]).astype(bf16)

    # layer-2 params padded to a lane-dense OUT_PAD-wide slab (zeros beyond
    # out_channels keep the padded lanes inert through the kernel).
    w2p = jnp.zeros((params["w2"].shape[0], OUT_PAD), jnp.float32)
    w2p = w2p.at[:, :out_channels].set(params["w2"])
    att2 = jnp.zeros((OUT_PAD, 2), jnp.float32)
    att2 = att2.at[:out_channels, 0].set(params["att_dst2"][0])
    att2 = att2.at[:out_channels, 1].set(params["att_src2"][0])
    b2p = jnp.zeros((1, OUT_PAD), jnp.float32)
    b2p = b2p.at[0, :out_channels].set(params["bias2"])

    # bf16 additive attention mask, computed once outside the kernel.
    adj_bias = jnp.where(adj > 0, 0.0, -1e30).astype(bf16)

    kernel = functools.partial(_fused_gat_kernel, heads=heads1,
                               c1=hidden_channels, out_channels=out_channels,
                               negative_slope=0.2)
    vmem = pl.BlockSpec(memory_space=pltpu.MemorySpace.VMEM)
    out_pad = pl.pallas_call(
        kernel,
        out_shape=jax.ShapeDtypeStruct((n, OUT_PAD), jnp.float32),
        in_specs=[vmem] * 8,
        out_specs=vmem,
        scratch_shapes=[pltpu.VMEM((n, heads1 * hidden_channels), jnp.float32)],
        compiler_params=pltpu.CompilerParams(
            vmem_limit_bytes=_vmem_limit_bytes(n, x.shape[1],
                                               heads1 * hidden_channels)),
    )(x.astype(bf16), params["w1"].astype(bf16), att1,
      params["bias1"].reshape(1, -1),
      w2p.astype(bf16), att2.astype(bf16), b2p, adj_bias)
    return out_pad[:, :out_channels]


def init_gat_params(key, in_channels, hidden_channels, out_channels):
    heads1, heads2 = 4, 1
    k = jax.random.split(key, 6)

    def glorot(rng, shape):
        fan_in, fan_out = shape[-2], shape[-1]
        lim = (6.0 / (fan_in + fan_out)) ** 0.5
        return jax.random.uniform(rng, shape, jnp.float32, -lim, lim)

    return {
        "w1": glorot(k[0], (in_channels, heads1 * hidden_channels)),
        "att_src1": glorot(k[1], (heads1, hidden_channels)),
        "att_dst1": glorot(k[2], (heads1, hidden_channels)),
        "bias1": jnp.zeros((heads1 * hidden_channels,), jnp.float32),
        "w2": glorot(k[3], (heads1 * hidden_channels, heads2 * out_channels)),
        "att_src2": glorot(k[4], (heads2, out_channels)),
        "att_dst2": glorot(k[5], (heads2, out_channels)),
        "bias2": jnp.zeros((heads2 * out_channels,), jnp.float32),
    }


# ----------------------------------------------------------------------------
# Pure-JAX f32 reference for the correctness check.
# ----------------------------------------------------------------------------
def _ref_gat_layer(x, w, att_src, att_dst, bias, adj, heads, out_channels, apply_relu):
    xp = x @ w
    outs = []
    for h in range(heads):
        xh = xp[:, h * out_channels:(h + 1) * out_channels]
        a_src = jnp.sum(xh * att_src[h][None, :], axis=-1)
        a_dst = jnp.sum(xh * att_dst[h][None, :], axis=-1)
        s = a_dst[:, None] + a_src[None, :]
        s = jnp.where(s > 0, s, 0.2 * s)
        s = jnp.where(adj > 0, s, -jnp.inf)
        alpha = jax.nn.softmax(s, axis=-1)
        outs.append(alpha @ xh)
    out = jnp.concatenate(outs, axis=-1) + bias[None, :]
    return jnp.maximum(out, 0.0) if apply_relu else out


def _ref_forward(params, x, adj, hidden_channels, out_channels):
    h = _ref_gat_layer(x, params["w1"], params["att_src1"], params["att_dst1"],
                       params["bias1"], adj, 4, hidden_channels, True)
    return _ref_gat_layer(h, params["w2"], params["att_src2"], params["att_dst2"],
                          params["bias2"], adj, 1, out_channels, False)


if __name__ == "__main__":
    key = jax.random.PRNGKey(0)

    # Synthetic graph standing in for the COCO-triplet graph:
    num_nodes = 32
    in_channels = num_nodes          # x = identity features, as in the original script
    hidden_channels = 8
    out_channels = 4
    num_edges = 64

    k_edges, k_params = jax.random.split(key)
    k_src, k_dst = jax.random.split(k_edges)
    src = jax.random.randint(k_src, (num_edges,), 0, num_nodes)
    dst = jax.random.randint(k_dst, (num_edges,), 0, num_nodes)

    # Dense adjacency mask adj[target, source], with GATConv's default self-loops.
    adj = jnp.zeros((num_nodes, num_nodes), jnp.float32)
    adj = adj.at[dst, src].set(1.0)
    adj = adj.at[jnp.arange(num_nodes), jnp.arange(num_nodes)].set(1.0)

    # Self-loops guarantee every target row has >=1 unmasked source, so the
    # -1e30 mask sentinel never faces an all-masked softmax row.
    assert bool(jnp.all(adj.sum(axis=1) > 0))

    x = jnp.eye(num_nodes, dtype=jnp.float32)   # identity node features

    params = init_gat_params(k_params, in_channels, hidden_channels, out_channels)

    forward = jax.jit(functools.partial(gat_model_forward,
                                        hidden_channels=hidden_channels,
                                        out_channels=out_channels))
    out = jax.block_until_ready(forward(params, x, adj))

    ref = _ref_forward(params, x, adj, hidden_channels, out_channels)
    assert out.shape == (num_nodes, out_channels)
    # bf16 MXU operands (values, logits, softmax probabilities + folded
    # denominator) and the approx reciprocal give a slightly looser tolerance
    # than the pure-f32 reference.
    assert jnp.allclose(out, ref, atol=4e-2, rtol=4e-2), "mismatch vs reference"

    print("KERNEL_OK")
</pallas_src>

<mosaic_0001>
module attributes {stable_mosaic.version = 11 : i64} {
  func.func @_fused_gat_kernel(%arg0: memref<32x32xbf16, #tpu.memory_space<vmem>>, %arg1: memref<32x32xbf16, #tpu.memory_space<vmem>>, %arg2: memref<32x8xbf16, #tpu.memory_space<vmem>>, %arg3: memref<1x32xf32, #tpu.memory_space<vmem>>, %arg4: memref<32x128xbf16, #tpu.memory_space<vmem>>, %arg5: memref<128x2xbf16, #tpu.memory_space<vmem>>, %arg6: memref<1x128xf32, #tpu.memory_space<vmem>>, %arg7: memref<32x32xbf16, #tpu.memory_space<vmem>>, %arg8: memref<32x128xf32, #tpu.memory_space<vmem>>, %arg9: memref<32x32xf32, #tpu.memory_space<vmem>>) attributes {dimension_semantics = [], scalar_prefetch = 0 : i64, scratch_operands = 1 : i64, tpu.core_type = #tpu.core_type<tc>} {
    %c0 = arith.constant 0 : index
    %c0_0 = arith.constant 0 : index
    %0 = vector.load %arg7[%c0, %c0_0] : memref<32x32xbf16, #tpu.memory_space<vmem>>, vector<32x32xbf16>
    %c0_1 = arith.constant 0 : index
    %c0_2 = arith.constant 0 : index
    %1 = vector.load %arg0[%c0_1, %c0_2] : memref<32x32xbf16, #tpu.memory_space<vmem>>, vector<32x32xbf16>
    %c0_3 = arith.constant 0 : index
    %c0_4 = arith.constant 0 : index
    %2 = vector.load %arg1[%c0_3, %c0_4] : memref<32x32xbf16, #tpu.memory_space<vmem>>, vector<32x32xbf16>
    %cst = arith.constant dense<0.000000e+00> : vector<32x32xf32>
    %3 = tpu.matmul %1, %2, %cst {dimension_numbers = #tpu.dot_dimension_numbers<[1], [0], [0], [1], [0, 0, 1, 1], [], []>} : vector<32x32xbf16>, vector<32x32xbf16>, vector<32x32xf32> -> vector<32x32xf32>
    %4 = arith.truncf %3 : vector<32x32xf32> to vector<32x32xbf16>
    %c0_5 = arith.constant 0 : index
    %c0_6 = arith.constant 0 : index
    %5 = vector.load %arg2[%c0_5, %c0_6] : memref<32x8xbf16, #tpu.memory_space<vmem>>, vector<32x8xbf16>
    %cst_7 = arith.constant dense<0.000000e+00> : vector<32x8xf32>
    %6 = tpu.matmul %4, %5, %cst_7 {dimension_numbers = #tpu.dot_dimension_numbers<[1], [0], [0], [1], [0, 0, 1, 1], [], []>} : vector<32x32xbf16>, vector<32x8xbf16>, vector<32x8xf32> -> vector<32x8xf32>
    %7 = vector.extract_strided_slice %6 {offsets = [0, 4], sizes = [32, 4], strides = [1, 1]} : vector<32x8xf32> to vector<32x4xf32>
    %8 = tpu.transpose %7, [1, 0] : vector<32x4xf32> -> vector<4x32xf32>
    %9 = vector.extract_strided_slice %6 {offsets = [0, 4], sizes = [32, 4], strides = [1, 1]} : vector<32x8xf32> to vector<32x4xf32>
    %cst_8 = arith.constant dense<0xFF800000> : vector<4xf32>
    %10 = vector.multi_reduction <maximumf>, %9, %cst_8 [0] : vector<32x4xf32> to vector<4xf32>
    %11 = vector.shape_cast %10 : vector<4xf32> to vector<1x4xf32>
    %cst_9 = arith.constant 1.000000e+00 : bf16
    %12 = vector.broadcast %cst_9 : bf16 to vector<32x1xbf16>
    %13 = vector.extract_strided_slice %4 {offsets = [0, 0], sizes = [32, 8], strides = [1, 1]} : vector<32x32xbf16> to vector<32x8xbf16>
    %14 = tpu.concatenate %13, %12 in 1 : vector<32x8xbf16>, vector<32x1xbf16> -> vector<32x9xbf16>
    %15 = vector.extract_strided_slice %6 {offsets = [0, 0], sizes = [32, 1], strides = [1, 1]} : vector<32x8xf32> to vector<32x1xf32>
    %16 = vector.extract_strided_slice %8 {offsets = [0, 0], sizes = [1, 32], strides = [1, 1]} : vector<4x32xf32> to vector<1x32xf32>
    %17 = vector.extract_strided_slice %11 {offsets = [0, 0], sizes = [1, 1], strides = [1, 1]} : vector<1x4xf32> to vector<1x1xf32>
    %18 = vector.broadcast %15 : vector<32x1xf32> to vector<32x32xf32>
    %19 = vector.broadcast %16 : vector<1x32xf32> to vector<32x32xf32>
    %20 = arith.addf %18, %19 : vector<32x32xf32>
    %cst_10 = arith.constant 2.000000e-01 : f32
    %21 = vector.broadcast %cst_10 : f32 to vector<32x32xf32>
    %22 = arith.mulf %21, %20 : vector<32x32xf32>
    %23 = arith.maximumf %20, %22 : vector<32x32xf32>
    %24 = vector.broadcast %17 : vector<1x1xf32> to vector<32x1xf32>
    %25 = arith.addf %15, %24 : vector<32x1xf32>
    %cst_11 = arith.constant 2.000000e-01 : f32
    %26 = vector.broadcast %cst_11 : f32 to vector<32x1xf32>
    %27 = arith.mulf %26, %25 : vector<32x1xf32>
    %28 = arith.maximumf %25, %27 : vector<32x1xf32>
    %29 = vector.broadcast %28 : vector<32x1xf32> to vector<32x32xf32>
    %30 = arith.subf %23, %29 : vector<32x32xf32>
    %31 = arith.extf %0 : vector<32x32xbf16> to vector<32x32xf32>
    %32 = arith.addf %30, %31 : vector<32x32xf32>
    %33 = math.exp %32 : vector<32x32xf32>
    %34 = arith.truncf %33 : vector<32x32xf32> to vector<32x32xbf16>
    %cst_12 = arith.constant dense<0.000000e+00> : vector<32x9xf32>
    %35 = tpu.matmul %34, %14, %cst_12 {dimension_numbers = #tpu.dot_dimension_numbers<[1], [0], [0], [1], [0, 0, 1, 1], [], []>} : vector<32x32xbf16>, vector<32x9xbf16>, vector<32x9xf32> -> vector<32x9xf32>
    %36 = vector.extract_strided_slice %35 {offsets = [0, 8], sizes = [32, 1], strides = [1, 1]} : vector<32x9xf32> to vector<32x1xf32>
    %37 = tpu.reciprocal %36 {approx = true} : vector<32x1xf32> -> vector<32x1xf32>
    %38 = vector.broadcast %37 : vector<32x1xf32> to vector<32x9xf32>
    %39 = arith.mulf %35, %38 : vector<32x9xf32>
    %40 = vector.extract_strided_slice %39 {offsets = [0, 0], sizes = [32, 8], strides = [1, 1]} : vector<32x9xf32> to vector<32x8xf32>
    %c0_13 = arith.constant 0 : index
    %c0_14 = arith.constant 0 : index
    %41 = vector.load %arg9[%c0_13, %c0_14] : memref<32x32xf32, #tpu.memory_space<vmem>>, vector<32x8xf32>
    tpu.vector_store %arg9[%c0_13, %c0_14], %40 {strides = array<i32>} : memref<32x32xf32, #tpu.memory_space<vmem>>, vector<32x8xf32>,
    %42 = vector.extract_strided_slice %4 {offsets = [0, 8], sizes = [32, 8], strides = [1, 1]} : vector<32x32xbf16> to vector<32x8xbf16>
    %43 = tpu.concatenate %42, %12 in 1 : vector<32x8xbf16>, vector<32x1xbf16> -> vector<32x9xbf16>
    %44 = vector.extract_strided_slice %6 {offsets = [0, 1], sizes = [32, 1], strides = [1, 1]} : vector<32x8xf32> to vector<32x1xf32>
    %45 = vector.extract_strided_slice %8 {offsets = [1, 0], sizes = [1, 32], strides = [1, 1]} : vector<4x32xf32> to vector<1x32xf32>
    %46 = vector.extract_strided_slice %11 {offsets = [0, 1], sizes = [1, 1], strides = [1, 1]} : vector<1x4xf32> to vector<1x1xf32>
    %47 = vector.broadcast %44 : vector<32x1xf32> to vector<32x32xf32>
    %48 = vector.broadcast %45 : vector<1x32xf32> to vector<32x32xf32>
    %49 = arith.addf %47, %48 : vector<32x32xf32>
    %cst_15 = arith.constant 2.000000e-01 : f32
    %50 = vector.broadcast %cst_15 : f32 to vector<32x32xf32>
    %51 = arith.mulf %50, %49 : vector<32x32xf32>
    %52 = arith.maximumf %49, %51 : vector<32x32xf32>
    %53 = vector.broadcast %46 : vector<1x1xf32> to vector<32x1xf32>
    %54 = arith.addf %44, %53 : vector<32x1xf32>
    %cst_16 = arith.constant 2.000000e-01 : f32
    %55 = vector.broadcast %cst_16 : f32 to vector<32x1xf32>
    %56 = arith.mulf %55, %54 : vector<32x1xf32>
    %57 = arith.maximumf %54, %56 : vector<32x1xf32>
    %58 = vector.broadcast %57 : vector<32x1xf32> to vector<32x32xf32>
    %59 = arith.subf %52, %58 : vector<32x32xf32>
    %60 = arith.extf %0 : vector<32x32xbf16> to vector<32x32xf32>
    %61 = arith.addf %59, %60 : vector<32x32xf32>
    %62 = math.exp %61 : vector<32x32xf32>
    %63 = arith.truncf %62 : vector<32x32xf32> to vector<32x32xbf16>
    %cst_17 = arith.constant dense<0.000000e+00> : vector<32x9xf32>
    %64 = tpu.matmul %63, %43, %cst_17 {dimension_numbers = #tpu.dot_dimension_numbers<[1], [0], [0], [1], [0, 0, 1, 1], [], []>} : vector<32x32xbf16>, vector<32x9xbf16>, vector<32x9xf32> -> vector<32x9xf32>
    %65 = vector.extract_strided_slice %64 {offsets = [0, 8], sizes = [32, 1], strides = [1, 1]} : vector<32x9xf32> to vector<32x1xf32>
    %66 = tpu.reciprocal %65 {approx = true} : vector<32x1xf32> -> vector<32x1xf32>
    %67 = vector.broadcast %66 : vector<32x1xf32> to vector<32x9xf32>
    %68 = arith.mulf %64, %67 : vector<32x9xf32>
    %69 = vector.extract_strided_slice %68 {offsets = [0, 0], sizes = [32, 8], strides = [1, 1]} : vector<32x9xf32> to vector<32x8xf32>
    %c0_18 = arith.constant 0 : index
    %c8 = arith.constant 8 : index
    %70 = vector.load %arg9[%c0_18, %c8] : memref<32x32xf32, #tpu.memory_space<vmem>>, vector<32x8xf32>
    tpu.vector_store %arg9[%c0_18, %c8], %69 {strides = array<i32>} : memref<32x32xf32, #tpu.memory_space<vmem>>, vector<32x8xf32>,
    %71 = vector.extract_strided_slice %4 {offsets = [0, 16], sizes = [32, 8], strides = [1, 1]} : vector<32x32xbf16> to vector<32x8xbf16>
    %72 = tpu.concatenate %71, %12 in 1 : vector<32x8xbf16>, vector<32x1xbf16> -> vector<32x9xbf16>
    %73 = vector.extract_strided_slice %6 {offsets = [0, 2], sizes = [32, 1], strides = [1, 1]} : vector<32x8xf32> to vector<32x1xf32>
    %74 = vector.extract_strided_slice %8 {offsets = [2, 0], sizes = [1, 32], strides = [1, 1]} : vector<4x32xf32> to vector<1x32xf32>
    %75 = vector.extract_strided_slice %11 {offsets = [0, 2], sizes = [1, 1], strides = [1, 1]} : vector<1x4xf32> to vector<1x1xf32>
    %76 = vector.broadcast %73 : vector<32x1xf32> to vector<32x32xf32>
    %77 = vector.broadcast %74 : vector<1x32xf32> to vector<32x32xf32>
    %78 = arith.addf %76, %77 : vector<32x32xf32>
    %cst_19 = arith.constant 2.000000e-01 : f32
    %79 = vector.broadcast %cst_19 : f32 to vector<32x32xf32>
    %80 = arith.mulf %79, %78 : vector<32x32xf32>
    %81 = arith.maximumf %78, %80 : vector<32x32xf32>
    %82 = vector.broadcast %75 : vector<1x1xf32> to vector<32x1xf32>
    %83 = arith.addf %73, %82 : vector<32x1xf32>
    %cst_20 = arith.constant 2.000000e-01 : f32
    %84 = vector.broadcast %cst_20 : f32 to vector<32x1xf32>
    %85 = arith.mulf %84, %83 : vector<32x1xf32>
    %86 = arith.maximumf %83, %85 : vector<32x1xf32>
    %87 = vector.broadcast %86 : vector<32x1xf32> to vector<32x32xf32>
    %88 = arith.subf %81, %87 : vector<32x32xf32>
    %89 = arith.extf %0 : vector<32x32xbf16> to vector<32x32xf32>
    %90 = arith.addf %88, %89 : vector<32x32xf32>
    %91 = math.exp %90 : vector<32x32xf32>
    %92 = arith.truncf %91 : vector<32x32xf32> to vector<32x32xbf16>
    %cst_21 = arith.constant dense<0.000000e+00> : vector<32x9xf32>
    %93 = tpu.matmul %92, %72, %cst_21 {dimension_numbers = #tpu.dot_dimension_numbers<[1], [0], [0], [1], [0, 0, 1, 1], [], []>} : vector<32x32xbf16>, vector<32x9xbf16>, vector<32x9xf32> -> vector<32x9xf32>
    %94 = vector.extract_strided_slice %93 {offsets = [0, 8], sizes = [32, 1], strides = [1, 1]} : vector<32x9xf32> to vector<32x1xf32>
    %95 = tpu.reciprocal %94 {approx = true} : vector<32x1xf32> -> vector<32x1xf32>
    %96 = vector.broadcast %95 : vector<32x1xf32> to vector<32x9xf32>
    %97 = arith.mulf %93, %96 : vector<32x9xf32>
    %98 = vector.extract_strided_slice %97 {offsets = [0, 0], sizes = [32, 8], strides = [1, 1]} : vector<32x9xf32> to vector<32x8xf32>
    %c0_22 = arith.constant 0 : index
    %c16 = arith.constant 16 : index
    %99 = vector.load %arg9[%c0_22, %c16] : memref<32x32xf32, #tpu.memory_space<vmem>>, vector<32x8xf32>
    tpu.vector_store %arg9[%c0_22, %c16], %98 {strides = array<i32>} : memref<32x32xf32, #tpu.memory_space<vmem>>, vector<32x8xf32>,
    %100 = vector.extract_strided_slice %4 {offsets = [0, 24], sizes = [32, 8], strides = [1, 1]} : vector<32x32xbf16> to vector<32x8xbf16>
    %101 = tpu.concatenate %100, %12 in 1 : vector<32x8xbf16>, vector<32x1xbf16> -> vector<32x9xbf16>
    %102 = vector.extract_strided_slice %6 {offsets = [0, 3], sizes = [32, 1], strides = [1, 1]} : vector<32x8xf32> to vector<32x1xf32>
    %103 = vector.extract_strided_slice %8 {offsets = [3, 0], sizes = [1, 32], strides = [1, 1]} : vector<4x32xf32> to vector<1x32xf32>
    %104 = vector.extract_strided_slice %11 {offsets = [0, 3], sizes = [1, 1], strides = [1, 1]} : vector<1x4xf32> to vector<1x1xf32>
    %105 = vector.broadcast %102 : vector<32x1xf32> to vector<32x32xf32>
    %106 = vector.broadcast %103 : vector<1x32xf32> to vector<32x32xf32>
    %107 = arith.addf %105, %106 : vector<32x32xf32>
    %cst_23 = arith.constant 2.000000e-01 : f32
    %108 = vector.broadcast %cst_23 : f32 to vector<32x32xf32>
    %109 = arith.mulf %108, %107 : vector<32x32xf32>
    %110 = arith.maximumf %107, %109 : vector<32x32xf32>
    %111 = vector.broadcast %104 : vector<1x1xf32> to vector<32x1xf32>
    %112 = arith.addf %102, %111 : vector<32x1xf32>
    %cst_24 = arith.constant 2.000000e-01 : f32
    %113 = vector.broadcast %cst_24 : f32 to vector<32x1xf32>
    %114 = arith.mulf %113, %112 : vector<32x1xf32>
    %115 = arith.maximumf %112, %114 : vector<32x1xf32>
    %116 = vector.broadcast %115 : vector<32x1xf32> to vector<32x32xf32>
    %117 = arith.subf %110, %116 : vector<32x32xf32>
    %118 = arith.extf %0 : vector<32x32xbf16> to vector<32x32xf32>
    %119 = arith.addf %117, %118 : vector<32x32xf32>
    %120 = math.exp %119 : vector<32x32xf32>
    %121 = arith.truncf %120 : vector<32x32xf32> to vector<32x32xbf16>
    %cst_25 = arith.constant dense<0.000000e+00> : vector<32x9xf32>
    %122 = tpu.matmul %121, %101, %cst_25 {dimension_numbers = #tpu.dot_dimension_numbers<[1], [0], [0], [1], [0, 0, 1, 1], [], []>} : vector<32x32xbf16>, vector<32x9xbf16>, vector<32x9xf32> -> vector<32x9xf32>
    %123 = vector.extract_strided_slice %122 {offsets = [0, 8], sizes = [32, 1], strides = [1, 1]} : vector<32x9xf32> to vector<32x1xf32>
    %124 = tpu.reciprocal %123 {approx = true} : vector<32x1xf32> -> vector<32x1xf32>
    %125 = vector.broadcast %124 : vector<32x1xf32> to vector<32x9xf32>
    %126 = arith.mulf %122, %125 : vector<32x9xf32>
    %127 = vector.extract_strided_slice %126 {offsets = [0, 0], sizes = [32, 8], strides = [1, 1]} : vector<32x9xf32> to vector<32x8xf32>
    %c0_26 = arith.constant 0 : index
    %c24 = arith.constant 24 : index
    %128 = vector.load %arg9[%c0_26, %c24] : memref<32x32xf32, #tpu.memory_space<vmem>>, vector<32x8xf32>
    tpu.vector_store %arg9[%c0_26, %c24], %127 {strides = array<i32>} : memref<32x32xf32, #tpu.memory_space<vmem>>, vector<32x8xf32>,
    %c0_27 = arith.constant 0 : index
    %c0_28 = arith.constant 0 : index
    %129 = vector.load %arg9[%c0_27, %c0_28] : memref<32x32xf32, #tpu.memory_space<vmem>>, vector<32x32xf32>
    %c0_29 = arith.constant 0 : index
    %c0_30 = arith.constant 0 : index
    %130 = vector.load %arg3[%c0_29, %c0_30] : memref<1x32xf32, #tpu.memory_space<vmem>>, vector<1x32xf32>
    %131 = vector.broadcast %130 : vector<1x32xf32> to vector<32x32xf32>
    %132 = arith.addf %129, %131 : vector<32x32xf32>
    %cst_31 = arith.constant 0.000000e+00 : f32
    %133 = vector.broadcast %cst_31 : f32 to vector<32x32xf32>
    %134 = arith.maximumf %132, %133 : vector<32x32xf32>
    %135 = arith.truncf %134 : vector<32x32xf32> to vector<32x32xbf16>
    %c0_32 = arith.constant 0 : index
    %c0_33 = arith.constant 0 : index
    %136 = vector.load %arg4[%c0_32, %c0_33] : memref<32x128xbf16, #tpu.memory_space<vmem>>, vector<32x128xbf16>
    %cst_34 = arith.constant dense<0.000000e+00> : vector<32x128xf32>
    %137 = tpu.matmul %135, %136, %cst_34 {dimension_numbers = #tpu.dot_dimension_numbers<[1], [0], [0], [1], [0, 0, 1, 1], [], []>} : vector<32x32xbf16>, vector<32x128xbf16>, vector<32x128xf32> -> vector<32x128xf32>
    %138 = tpu.iota {dimensions = array<i32: 1>} : vector<32x128xi32>
    %c4_i32 = arith.constant 4 : i32
    %139 = vector.broadcast %c4_i32 : i32 to vector<32x128xi32>
    %140 = arith.cmpi eq, %138, %139 : vector<32x128xi32>
    %cst_35 = arith.constant 1.000000e+00 : f32
    %141 = vector.broadcast %cst_35 : f32 to vector<32x128xf32>
    %142 = arith.select %140, %141, %137 : vector<32x128xi1>, vector<32x128xf32>
    %143 = arith.truncf %142 : vector<32x128xf32> to vector<32x128xbf16>
    %c0_36 = arith.constant 0 : index
    %c0_37 = arith.constant 0 : index
    %144 = vector.load %arg5[%c0_36, %c0_37] : memref<128x2xbf16, #tpu.memory_space<vmem>>, vector<128x2xbf16>
    %cst_38 = arith.constant dense<0.000000e+00> : vector<32x2xf32>
    %145 = tpu.matmul %143, %144, %cst_38 {dimension_numbers = #tpu.dot_dimension_numbers<[1], [0], [0], [1], [0, 0, 1, 1], [], []>} : vector<32x128xbf16>, vector<128x2xbf16>, vector<32x2xf32> -> vector<32x2xf32>
    %146 = vector.extract_strided_slice %145 {offsets = [0, 1], sizes = [32, 1], strides = [1, 1]} : vector<32x2xf32> to vector<32x1xf32>
    %cst_39 = arith.constant dense<0xFF800000> : vector<1xf32>
    %147 = vector.multi_reduction <maximumf>, %146, %cst_39 [0] : vector<32x1xf32> to vector<1xf32>
    %148 = vector.shape_cast %147 : vector<1xf32> to vector<1x1xf32>
    %149 = vector.extract_strided_slice %145 {offsets = [0, 0], sizes = [32, 1], strides = [1, 1]} : vector<32x2xf32> to vector<32x1xf32>
    %150 = vector.extract_strided_slice %145 {offsets = [0, 1], sizes = [32, 1], strides = [1, 1]} : vector<32x2xf32> to vector<32x1xf32>
    %151 = tpu.transpose %150, [1, 0] : vector<32x1xf32> -> vector<1x32xf32>
    %152 = vector.broadcast %149 : vector<32x1xf32> to vector<32x32xf32>
    %153 = vector.broadcast %151 : vector<1x32xf32> to vector<32x32xf32>
    %154 = arith.addf %152, %153 : vector<32x32xf32>
    %cst_40 = arith.constant 2.000000e-01 : f32
    %155 = vector.broadcast %cst_40 : f32 to vector<32x32xf32>
    %156 = arith.mulf %155, %154 : vector<32x32xf32>
    %157 = arith.maximumf %154, %156 : vector<32x32xf32>
    %158 = vector.broadcast %148 : vector<1x1xf32> to vector<32x1xf32>
    %159 = arith.addf %149, %158 : vector<32x1xf32>
    %cst_41 = arith.constant 2.000000e-01 : f32
    %160 = vector.broadcast %cst_41 : f32 to vector<32x1xf32>
    %161 = arith.mulf %160, %159 : vector<32x1xf32>
    %162 = arith.maximumf %159, %161 : vector<32x1xf32>
    %163 = vector.broadcast %162 : vector<32x1xf32> to vector<32x32xf32>
    %164 = arith.subf %157, %163 : vector<32x32xf32>
    %165 = arith.extf %0 : vector<32x32xbf16> to vector<32x32xf32>
    %166 = arith.addf %164, %165 : vector<32x32xf32>
    %167 = math.exp %166 : vector<32x32xf32>
    %168 = arith.truncf %167 : vector<32x32xf32> to vector<32x32xbf16>
    %cst_42 = arith.constant dense<0.000000e+00> : vector<32x128xf32>
    %169 = tpu.matmul %168, %143, %cst_42 {dimension_numbers = #tpu.dot_dimension_numbers<[1], [0], [0], [1], [0, 0, 1, 1], [], []>} : vector<32x32xbf16>, vector<32x128xbf16>, vector<32x128xf32> -> vector<32x128xf32>
    %170 = vector.extract_strided_slice %169 {offsets = [0, 4], sizes = [32, 1], strides = [1, 1]} : vector<32x128xf32> to vector<32x1xf32>
    %171 = tpu.reciprocal %170 {approx = true} : vector<32x1xf32> -> vector<32x1xf32>
    %172 = vector.broadcast %171 : vector<32x1xf32> to vector<32x128xf32>
    %173 = arith.mulf %169, %172 : vector<32x128xf32>
    %c0_43 = arith.constant 0 : index
    %c0_44 = arith.constant 0 : index
    %174 = vector.load %arg6[%c0_43, %c0_44] : memref<1x128xf32, #tpu.memory_space<vmem>>, vector<1x128xf32>
    %175 = vector.broadcast %174 : vector<1x128xf32> to vector<32x128xf32>
    %176 = arith.addf %173, %175 : vector<32x128xf32>
    %c0_45 = arith.constant 0 : index
    %c0_46 = arith.constant 0 : index
    %177 = vector.load %arg8[%c0_45, %c0_46] : memref<32x128xf32, #tpu.memory_space<vmem>>, vector<32x128xf32>
    tpu.vector_store %arg8[%c0_45, %c0_46], %176 {strides = array<i32>} : memref<32x128xf32, #tpu.memory_space<vmem>>, vector<32x128xf32>,
    return
  }
}

</mosaic_0001>

<llo_original>
// kernel: gat_model_forward.1
$region0: #{gat_model_forward.1}
  #allocation0 [shape = 'u32[]', space=smem, size = 0x4, offset = 0x4, fixed_abs, tag = 'smem constant byte address 0x4 - core index']
  #allocation1 [shape = 'u32[72,128]{1,0:T(1,128)}', space=vmem, size = 0x9000, scoped, tag = 'internal scratch']
  #allocation2 [shape = 'f32[32,32]{1,0:T(8,128)}', space=vmem, size = 0x4000, scoped, tag = 'scratch operand']
  %s0 = inlined_call_operand.vmem [shape: bf16[32,32], index: 0, kind: input, shape index: {}]
  %s1 = inlined_call_operand.vmem [shape: bf16[32,32], index: 1, kind: input, shape index: {}]
  %s2 = inlined_call_operand.vmem [shape: bf16[32,8], index: 2, kind: input, shape index: {}]
  %s3 = inlined_call_operand.vmem [shape: f32[1,32], index: 3, kind: input, shape index: {}]
  %s4 = inlined_call_operand.vmem [shape: bf16[32,128], index: 4, kind: input, shape index: {}]
  %s5 = inlined_call_operand.vmem [shape: bf16[128,2], index: 5, kind: input, shape index: {}]
  %s6 = inlined_call_operand.vmem [shape: f32[1,128], index: 6, kind: input, shape index: {}]
  %s7 = inlined_call_operand.vmem [shape: bf16[32,32], index: 7, kind: input, shape index: {}]
  %s8 = inlined_call_operand.vmem [shape: f32[32,128], index: 8, kind: output, shape index: {}]
  %s9 = sld [smem:[#allocation0]]
  $region42: #{gat_model_forward.1} parent=0
    _
  %s11 = ssub.s32 1, %s9
  %s12 = scalar_select 0, %s11, %s9
  // Predicated region
  $region2: #{gat_model_forward.1} parent=0 // pred_check
    _
  $region3: #{gat_model_forward.1} parent=0 // pred_check_branch
    %14 = sbr.rel (0) target = $region5
  $region4: #{gat_model_forward.1} parent=0 // pred_region
    _
  $region5: #{gat_model_forward.1} parent=0 // pred_fallthru
    _
  // Predicated region
  $region6: #{gat_model_forward.1} parent=0 // pred_check
    _
  $region7: #{gat_model_forward.1} parent=0 // pred_check_branch
    %16 = sbr.rel (0) target = $region9
  $region8: #{gat_model_forward.1} parent=0 // pred_region
    _
  $region9: #{gat_model_forward.1} parent=0 // pred_fallthru
    _
  // Predicated region
  $region10: #{gat_model_forward.1} parent=0 // pred_check
    _
  $region11: #{gat_model_forward.1} parent=0 // pred_check_branch
    %18 = sbr.rel (0) target = $region13
  $region12: #{gat_model_forward.1} parent=0 // pred_region
    _
  $region13: #{gat_model_forward.1} parent=0 // pred_fallthru
    _
  // Predicated region
  $region14: #{gat_model_forward.1} parent=0 // pred_check
    _
  $region15: #{gat_model_forward.1} parent=0 // pred_check_branch
    %20 = sbr.rel (0) target = $region17
  $region16: #{gat_model_forward.1} parent=0 // pred_region
    _
  $region17: #{gat_model_forward.1} parent=0 // pred_fallthru
    _
  // Predicated region
  $region18: #{gat_model_forward.1} parent=0 // pred_check
    _
  $region19: #{gat_model_forward.1} parent=0 // pred_check_branch
    %22 = sbr.rel (0) target = $region21
  $region20: #{gat_model_forward.1} parent=0 // pred_region
    _
  $region21: #{gat_model_forward.1} parent=0 // pred_fallthru
    _
  // Predicated region
  $region22: #{gat_model_forward.1} parent=0 // pred_check
    _
  $region23: #{gat_model_forward.1} parent=0 // pred_check_branch
    %24 = sbr.rel (0) target = $region25
  $region24: #{gat_model_forward.1} parent=0 // pred_region
    _
  $region25: #{gat_model_forward.1} parent=0 // pred_fallthru
    _
  // Predicated region
  $region26: #{gat_model_forward.1} parent=0 // pred_check
    _
  $region27: #{gat_model_forward.1} parent=0 // pred_check_branch
    %26 = sbr.rel (0) target = $region29
  $region28: #{gat_model_forward.1} parent=0 // pred_region
    _
  $region29: #{gat_model_forward.1} parent=0 // pred_fallthru
    _
  // Predicated region
  $region30: #{gat_model_forward.1} parent=0 // pred_check
    _
  $region31: #{gat_model_forward.1} parent=0 // pred_check_branch
    %28 = sbr.rel (0) target = $region33
  $region32: #{gat_model_forward.1} parent=0 // pred_region
    _
  $region33: #{gat_model_forward.1} parent=0 // pred_fallthru
    _
  %v31 = vld [vmem:[%s7] sm:$0xf]
  %v32 = vld [vmem:[%s7 + $0x4] sm:$0xf]
  %v33 = vld [vmem:[%s7 + $0x8] sm:$0xf]
  %v34 = vld [vmem:[%s7 + $0xc] sm:$0xf]
  %v35 = vld [vmem:[%s0] sm:$0xf]
  %v36 = vld [vmem:[%s0 + $0x4] sm:$0xf]
  %v37 = vld [vmem:[%s0 + $0x8] sm:$0xf]
  %v38 = vld [vmem:[%s0 + $0xc] sm:$0xf]
  %v39 = vld [vmem:[%s1] sm:$0xf]
  %v40 = vld [vmem:[%s1 + $0x4] sm:$0xf]
  %v41 = vld [vmem:[%s1 + $0x8] sm:$0xf]
  %v42 = vld [vmem:[%s1 + $0xc] sm:$0xf]
  %v47 = vunpack.c.l.b16 %v35
  %v48 = vunpack.c.l.b16 %v36
  %v49 = vunpack.c.l.b16 %v37
  %v50 = vunpack.c.l.b16 %v38
  %v51 = vpack.c.b16 %v48, %v47
  %v52 = vpack.c.b16 %v50, %v49
  %v57 = vunpack.c.l.b16 %v39
  %v58 = vunpack.c.l.b16 %v40
  %v59 = vunpack.c.l.b16 %v41
  %v60 = vunpack.c.l.b16 %v42
  %v61 = vpack.c.b16 %v58, %v57
  %v62 = vpack.c.b16 %v60, %v59
  %vm65 = vcmask 261120
  %v67 = vsel %vm65, %v51, 0
  %v70 = vsel %vm65, %v52, 0
  %72 = vmatpush.bf16.msra.mxu0 0
  %73 = vmatpush.bf16.msra.mxu0 0
  %74 = vmatpush.bf16.msra.mxu0 0
  %75 = vmatpush.bf16.msra.mxu0 0
  %76 = vmatpush.bf16.msra.mxu0 0
  %77 = vmatpush.bf16.msra.mxu0 0
  %78 = vmatpush.bf16.msra.mxu0 %v62
  %79 = vmatpush.bf16.msra.mxu0 %v61
  %80 = vmatmul.bf16.gmra.mxu0 %v67
  %v81 = vpop.f32.mrf.mxu0
  %v82 = vadd.f32 0.0, %v81
  %v83 = vpop.f32.mrf.mxu0
  %v84 = vadd.f32 0.0, %v83
  %85 = vmatmul.bf16.gmra.mxu0 %v70
  %v86 = vpop.f32.mrf.mxu0
  %v87 = vadd.f32 0.0, %v86
  %v88 = vpop.f32.mrf.mxu0
  %v89 = vadd.f32 0.0, %v88
  %90 = vdwg.mxu0
  %v91 = vpack.c.bf16 %v82, %v82
  %v92 = vpack.c.bf16 %v84, %v84
  %v93 = vpack.c.bf16 %v87, %v87
  %v94 = vpack.c.bf16 %v89, %v89
  %v95 = vld [vmem:[%s2] sm:$0xf]
  %v96 = vld [vmem:[%s2 + $0x4] sm:$0xf]
  %v97 = vld [vmem:[%s2 + $0x8] sm:$0xf]
  %v98 = vld [vmem:[%s2 + $0xc] sm:$0xf]
  %v103 = vunpack.c.l.b16 %v91
  %v104 = vunpack.c.l.b16 %v92
  %v105 = vunpack.c.l.b16 %v93
  %v106 = vunpack.c.l.b16 %v94
  %v107 = vpack.c.b16 %v104, %v103
  %v108 = vpack.c.b16 %v106, %v105
  %v113 = vunpack.c.l.b16 %v95
  %v114 = vunpack.c.l.b16 %v96
  %v115 = vunpack.c.l.b16 %v97
  %v116 = vunpack.c.l.b16 %v98
  %v117 = vpack.c.b16 %v114, %v113
  %v118 = vpack.c.b16 %v116, %v115
  %v122 = vsel %vm65, %v107, 0
  %v125 = vsel %vm65, %v108, 0
  %127 = vmatpush.bf16.msra.mxu0 0
  %128 = vmatpush.bf16.msra.mxu0 0
  %129 = vmatpush.bf16.msra.mxu0 0
  %130 = vmatpush.bf16.msra.mxu0 0
  %131 = vmatpush.bf16.msra.mxu0 0
  %132 = vmatpush.bf16.msra.mxu0 0
  %133 = vmatpush.bf16.msra.mxu0 %v118
  %134 = vmatpush.bf16.msra.mxu0 %v117
  %135 = vmatmul.bf16.gmra.mxu0 %v122
  %v136 = vpop.f32.mrf.mxu0
  %v137 = vadd.f32 0.0, %v136
  %v138 = vpop.f32.mrf.mxu0
  %v139 = vadd.f32 0.0, %v138
  %140 = vmatmul.bf16.gmra.mxu0 %v125
  %v141 = vpop.f32.mrf.mxu0
  %v142 = vadd.f32 0.0, %v141
  %v143 = vpop.f32.mrf.mxu0
  %v144 = vadd.f32 0.0, %v143
  %145 = vdwg.mxu0
  %150 = vrot.lane.b32.xlu0 %v137, 124
  %v151 = vpop.permute.xlu0 %150
  %152 = vrot.lane.b32.xlu0 %v139, 124
  %v153 = vpop.permute.xlu0 %152
  %154 = vrot.lane.b32.xlu0 %v142, 124
  %v155 = vpop.permute.xlu0 %154
  %156 = vrot.lane.b32.xlu0 %v144, 124
  %v157 = vpop.permute.xlu0 %156
  %162 = vxpose.xlu0.b32.start [1/16] %v151, 128
  %163 = vxpose.xlu0.b32.cont [2/16] %v153, 128
  %164 = vxpose.xlu0.b32.cont [3/16] %v155, 128
  %165 = vxpose.xlu0.b32.cont [4/16] %v157, 128
  %166 = vxpose.xlu0.b32.cont [5/16] 0.0, 128
  %167 = vxpose.xlu0.b32.cont [6/16] 0.0, 128
  %168 = vxpose.xlu0.b32.cont [7/16] 0.0, 128
  %169 = vxpose.xlu0.b32.cont [8/16] 0.0, 128
  %170 = vxpose.xlu0.b32.cont [9/16] 0.0, 128
  %171 = vxpose.xlu0.b32.cont [10/16] 0.0, 128
  %172 = vxpose.xlu0.b32.cont [11/16] 0.0, 128
  %173 = vxpose.xlu0.b32.cont [12/16] 0.0, 128
  %174 = vxpose.xlu0.b32.cont [13/16] 0.0, 128
  %175 = vxpose.xlu0.b32.cont [14/16] 0.0, 128
  %176 = vxpose.xlu0.b32.cont [15/16] 0.0, 128
  %177 = vxpose.xlu0.b32.end [16/16] 0.0, 128
  %v178 = vpop.trf.xlu0
  %v179 = vpop.trf.xlu0
  %v180 = vpop.trf.xlu0
  %v181 = vpop.trf.xlu0
  %v182 = vpop.trf.xlu0
  %v183 = vpop.trf.xlu0
  %v184 = vpop.trf.xlu0
  %v185 = vpop.trf.xlu0
  %v186 = vpop.trf.xlu0
  %v187 = vpop.trf.xlu0
  %v188 = vpop.trf.xlu0
  %v189 = vpop.trf.xlu0
  %v190 = vpop.trf.xlu0
  %v191 = vpop.trf.xlu0
  %v192 = vpop.trf.xlu0
  %v193 = vpop.trf.xlu0
  %vm194 = vcmask 64544
  %v195 = vsel %vm194, %v137, -inf
  %v196 = vsel %vm194, %v139, -inf
  %v197 = vsel %vm194, %v142, -inf
  %v198 = vsel %vm194, %v144, -inf
  %v199 = vmax.f32 %v195, %v196
  %v200 = vmax.f32 %v197, %v198
  %v201 = vmax.f32 %v199, %v200
  %v202 = vrot.slane %v201, 4
  %v203 = vmax.f32 %v201, %v202
  %v204 = vrot.slane %v203, 2
  %v205 = vmax.f32 %v203, %v204
  %v206 = vrot.slane %v205, 1
  %v207 = vmax.f32 %v205, %v206
  %vm208 = vcmask 64512
  %v210 = vsel %vm208, %v107, 1065369472
  %v212 = vsel %vm208, %v108, 1065369472
  %214 = vset.pattern.permute.xlu0 0
  %215 = vperm.xlu0 %214, %v137
  %v216 = vpop.permute.xlu0 %215
  %218 = vset.pattern.permute.xlu0 0
  %219 = vperm.xlu0 %218, %v139
  %v220 = vpop.permute.xlu0 %219
  %222 = vset.pattern.permute.xlu0 0
  %223 = vperm.xlu0 %222, %v142
  %v224 = vpop.permute.xlu0 %223
  %226 = vset.pattern.permute.xlu0 0
  %227 = vperm.xlu0 %226, %v144
  %v228 = vpop.permute.xlu0 %227
  %v230 = vperm.slane %v178, 0
  %v231 = vadd.f32 %v216, %v230
  %v232 = vadd.f32 %v220, %v230
  %v233 = vadd.f32 %v224, %v230
  %v234 = vadd.f32 %v228, %v230
  %v235 = vmul.f32 %v231, 0.2
  %v236 = vmul.f32 %v232, 0.2
  %v237 = vmul.f32 %v233, 0.2
  %v238 = vmul.f32 %v234, 0.2
  %v239 = vmax.f32 %v231, %v235
  %v240 = vmax.f32 %v232, %v236
  %v241 = vmax.f32 %v233, %v237
  %v242 = vmax.f32 %v234, %v238
  %244 = vrot.lane.b32.xlu0 %v207, 124
  %v245 = vpop.permute.xlu0 %244
  %v247 = vadd.f32 %v137, %v245
  %v248 = vadd.f32 %v139, %v245
  %v249 = vadd.f32 %v142, %v245
  %v250 = vadd.f32 %v144, %v245
  %v251 = vmul.f32 %v247, 0.2
  %v252 = vmul.f32 %v248, 0.2
  %v253 = vmul.f32 %v249, 0.2
  %v254 = vmul.f32 %v250, 0.2
  %v255 = vmax.f32 %v247, %v251
  %v256 = vmax.f32 %v248, %v252
  %v257 = vmax.f32 %v249, %v253
  %v258 = vmax.f32 %v250, %v254
  %260 = vset.pattern.permute.xlu0 0
  %261 = vperm.xlu0 %260, %v255
  %v262 = vpop.permute.xlu0 %261
  %265 = vset.pattern.permute.xlu0 0
  %266 = vperm.xlu0 %265, %v256
  %v267 = vpop.permute.xlu0 %266
  %270 = vset.pattern.permute.xlu0 0
  %271 = vperm.xlu0 %270, %v257
  %v272 = vpop.permute.xlu0 %271
  %275 = vset.pattern.permute.xlu0 0
  %276 = vperm.xlu0 %275, %v258
  %v277 = vpop.permute.xlu0 %276
  %v279 = vsub.f32 %v239, %v262
  %v280 = vsub.f32 %v240, %v267
  %v281 = vsub.f32 %v241, %v272
  %v282 = vsub.f32 %v242, %v277
  %v283 = vunpack.c.l.bf16 %v31
  %v284 = vunpack.c.l.bf16 %v32
  %v285 = vunpack.c.l.bf16 %v33
  %v286 = vunpack.c.l.bf16 %v34
  %v287 = vadd.f32 %v279, %v283
  %v288 = vadd.f32 %v280, %v284
  %v289 = vadd.f32 %v281, %v285
  %v290 = vadd.f32 %v282, %v286
  %v291 = vmul.f32 %v287, 1.442695
  %v292 = vpow.pop %v291
  %v293 = vmul.f32 %v288, 1.442695
  %v294 = vpow.pop %v293
  %v295 = vmul.f32 %v289, 1.442695
  %v296 = vpow.pop %v295
  %v297 = vmul.f32 %v290, 1.442695
  %v298 = vpow.pop %v297
  %v299 = vpack.c.bf16 %v294, %v292
  %v300 = vpack.c.bf16 %v298, %v296
  %v302 = vsel %vm65, %v299, 0
  %v305 = vsel %vm65, %v300, 0
  %307 = vmatpush.bf16.msra.mxu0 0
  %308 = vmatpush.bf16.msra.mxu0 0
  %309 = vmatpush.bf16.msra.mxu0 0
  %310 = vmatpush.bf16.msra.mxu0 0
  %311 = vmatpush.bf16.msra.mxu0 0
  %312 = vmatpush.bf16.msra.mxu0 0
  %313 = vmatpush.bf16.msra.mxu0 %v212
  %314 = vmatpush.bf16.msra.mxu0 %v210
  %315 = vmatmul.bf16.gmra.mxu0 %v302
  %v316 = vpop.f32.mrf.mxu0
  %v317 = vadd.f32 0.0, %v316
  %v318 = vpop.f32.mrf.mxu0
  %v319 = vadd.f32 0.0, %v318
  %320 = vmatmul.bf16.gmra.mxu0 %v305
  %v321 = vpop.f32.mrf.mxu0
  %v322 = vadd.f32 0.0, %v321
  %v323 = vpop.f32.mrf.mxu0
  %v324 = vadd.f32 0.0, %v323
  %325 = vdwg.mxu0
  %v326 = vrcp.pop %v317
  %v327 = vrcp.pop %v319
  %v328 = vrcp.pop %v322
  %v329 = vrcp.pop %v324
  %331 = vset.pattern.permute.xlu0 8
  %332 = vperm.xlu0 %331, %v326
  %v333 = vpop.permute.xlu0 %332
  %336 = vset.pattern.permute.xlu0 8
  %337 = vperm.xlu0 %336, %v327
  %v338 = vpop.permute.xlu0 %337
  %341 = vset.pattern.permute.xlu0 8
  %342 = vperm.xlu0 %341, %v328
  %v343 = vpop.permute.xlu0 %342
  %346 = vset.pattern.permute.xlu0 8
  %347 = vperm.xlu0 %346, %v329
  %v348 = vpop.permute.xlu0 %347
  %v350 = vmul.f32 %v317, %v333
  %v351 = vmul.f32 %v319, %v338
  %v352 = vmul.f32 %v322, %v343
  %v353 = vmul.f32 %v324, %v348
  %354 = vst.msk [vmem:[#allocation2] sm:$0xff] %vm208, %v350
  %355 = vst.msk [vmem:[#allocation2 + $0x8] sm:$0xff] %vm208, %v351
  %356 = vst.msk [vmem:[#allocation2 + $0x10] sm:$0xff] %vm208, %v352
  %357 = vst.msk [vmem:[#allocation2 + $0x18] sm:$0xff] %vm208, %v353
  %358 = vrot.lane.b32.xlu0 %v107, 120
  %v359 = vpop.permute.xlu0 %358
  %360 = vrot.lane.b32.xlu0 %v108, 120
  %v361 = vpop.permute.xlu0 %360
  %v363 = vsel %vm208, %v359, 1065369472
  %v366 = vsel %vm208, %v361, 1065369472
  %368 = vset.pattern.permute.xlu0 1
  %369 = vperm.xlu0 %368, %v137
  %v370 = vpop.permute.xlu0 %369
  %372 = vset.pattern.permute.xlu0 1
  %373 = vperm.xlu0 %372, %v139
  %v374 = vpop.permute.xlu0 %373
  %376 = vset.pattern.permute.xlu0 1
  %377 = vperm.xlu0 %376, %v142
  %v378 = vpop.permute.xlu0 %377
  %380 = vset.pattern.permute.xlu0 1
  %381 = vperm.xlu0 %380, %v144
  %v382 = vpop.permute.xlu0 %381
  %v384 = vperm.slane %v178, 1
  %v385 = vadd.f32 %v370, %v384
  %v386 = vadd.f32 %v374, %v384
  %v387 = vadd.f32 %v378, %v384
  %v388 = vadd.f32 %v382, %v384
  %v389 = vmul.f32 %v385, 0.2
  %v390 = vmul.f32 %v386, 0.2
  %v391 = vmul.f32 %v387, 0.2
  %v392 = vmul.f32 %v388, 0.2
  %v393 = vmax.f32 %v385, %v389
  %v394 = vmax.f32 %v386, %v390
  %v395 = vmax.f32 %v387, %v391
  %v396 = vmax.f32 %v388, %v392
  %397 = vset.pattern.permute.xlu0 1
  %398 = vperm.xlu0 %397, %v255
  %v399 = vpop.permute.xlu0 %398
  %401 = vset.pattern.permute.xlu0 1
  %402 = vperm.xlu0 %401, %v256
  %v403 = vpop.permute.xlu0 %402
  %405 = vset.pattern.permute.xlu0 1
  %406 = vperm.xlu0 %405, %v257
  %v407 = vpop.permute.xlu0 %406
  %409 = vset.pattern.permute.xlu0 1
  %410 = vperm.xlu0 %409, %v258
  %v411 = vpop.permute.xlu0 %410
  %v413 = vsub.f32 %v393, %v399
  %v414 = vsub.f32 %v394, %v403
  %v415 = vsub.f32 %v395, %v407
  %v416 = vsub.f32 %v396, %v411
  %v417 = vadd.f32 %v413, %v283
  %v418 = vadd.f32 %v414, %v284
  %v419 = vadd.f32 %v415, %v285
  %v420 = vadd.f32 %v416, %v286
  %v421 = vmul.f32 %v417, 1.442695
  %v422 = vpow.pop %v421
  %v423 = vmul.f32 %v418, 1.442695
  %v424 = vpow.pop %v423
  %v425 = vmul.f32 %v419, 1.442695
  %v426 = vpow.pop %v425
  %v427 = vmul.f32 %v420, 1.442695
  %v428 = vpow.pop %v427
  %v429 = vpack.c.bf16 %v424, %v422
  %v430 = vpack.c.bf16 %v428, %v426
  %v432 = vsel %vm65, %v429, 0
  %v435 = vsel %vm65, %v430, 0
  %437 = vmatpush.bf16.msra.mxu0 0
  %438 = vmatpush.bf16.msra.mxu0 0
  %439 = vmatpush.bf16.msra.mxu0 0
  %440 = vmatpush.bf16.msra.mxu0 0
  %441 = vmatpush.bf16.msra.mxu0 0
  %442 = vmatpush.bf16.msra.mxu0 0
  %443 = vmatpush.bf16.msra.mxu0 %v366
  %444 = vmatpush.bf16.msra.mxu0 %v363
  %445 = vmatmul.bf16.gmra.mxu0 %v432
  %v446 = vpop.f32.mrf.mxu0
  %v447 = vadd.f32 0.0, %v446
  %v448 = vpop.f32.mrf.mxu0
  %v449 = vadd.f32 0.0, %v448
  %450 = vmatmul.bf16.gmra.mxu0 %v435
  %v451 = vpop.f32.mrf.mxu0
  %v452 = vadd.f32 0.0, %v451
  %v453 = vpop.f32.mrf.mxu0
  %v454 = vadd.f32 0.0, %v453
  %455 = vdwg.mxu0
  %v456 = vrcp.pop %v447
  %v457 = vrcp.pop %v449
  %v458 = vrcp.pop %v452
  %v459 = vrcp.pop %v454
  %461 = vset.pattern.permute.xlu0 8
  %462 = vperm.xlu0 %461, %v456
  %v463 = vpop.permute.xlu0 %462
  %466 = vset.pattern.permute.xlu0 8
  %467 = vperm.xlu0 %466, %v457
  %v468 = vpop.permute.xlu0 %467
  %471 = vset.pattern.permute.xlu0 8
  %472 = vperm.xlu0 %471, %v458
  %v473 = vpop.permute.xlu0 %472
  %476 = vset.pattern.permute.xlu0 8
  %477 = vperm.xlu0 %476, %v459
  %v478 = vpop.permute.xlu0 %477
  %v480 = vmul.f32 %v447, %v463
  %v481 = vmul.f32 %v449, %v468
  %v482 = vmul.f32 %v452, %v473
  %v483 = vmul.f32 %v454, %v478
  %488 = vrot.lane.b32.xlu0 %v480, 8
  %v489 = vpop.permute.xlu0 %488
  %490 = vrot.lane.b32.xlu0 %v481, 8
  %v491 = vpop.permute.xlu0 %490
  %492 = vrot.lane.b32.xlu0 %v482, 8
  %v493 = vpop.permute.xlu0 %492
  %494 = vrot.lane.b32.xlu0 %v483, 8
  %v495 = vpop.permute.xlu0 %494
  %vm500 = vcmask 130112
  %501 = vst.msk [vmem:[#allocation2] sm:$0xff] %vm500, %v489
  %502 = vst.msk [vmem:[#allocation2 + $0x8] sm:$0xff] %vm500, %v491
  %503 = vst.msk [vmem:[#allocation2 + $0x10] sm:$0xff] %vm500, %v493
  %504 = vst.msk [vmem:[#allocation2 + $0x18] sm:$0xff] %vm500, %v495
  %505 = vrot.lane.b32.xlu0 %v107, 112
  %v506 = vpop.permute.xlu0 %505
  %507 = vrot.lane.b32.xlu0 %v108, 112
  %v508 = vpop.permute.xlu0 %507
  %v510 = vsel %vm208, %v506, 1065369472
  %v513 = vsel %vm208, %v508, 1065369472
  %515 = vset.pattern.permute.xlu0 2
  %516 = vperm.xlu0 %515, %v137
  %v517 = vpop.permute.xlu0 %516
  %519 = vset.pattern.permute.xlu0 2
  %520 = vperm.xlu0 %519, %v139
  %v521 = vpop.permute.xlu0 %520
  %523 = vset.pattern.permute.xlu0 2
  %524 = vperm.xlu0 %523, %v142
  %v525 = vpop.permute.xlu0 %524
  %527 = vset.pattern.permute.xlu0 2
  %528 = vperm.xlu0 %527, %v144
  %v529 = vpop.permute.xlu0 %528
  %v531 = vperm.slane %v178, 2
  %v532 = vadd.f32 %v517, %v531
  %v533 = vadd.f32 %v521, %v531
  %v534 = vadd.f32 %v525, %v531
  %v535 = vadd.f32 %v529, %v531
  %v536 = vmul.f32 %v532, 0.2
  %v537 = vmul.f32 %v533, 0.2
  %v538 = vmul.f32 %v534, 0.2
  %v539 = vmul.f32 %v535, 0.2
  %v540 = vmax.f32 %v532, %v536
  %v541 = vmax.f32 %v533, %v537
  %v542 = vmax.f32 %v534, %v538
  %v543 = vmax.f32 %v535, %v539
  %544 = vset.pattern.permute.xlu0 2
  %545 = vperm.xlu0 %544, %v255
  %v546 = vpop.permute.xlu0 %545
  %548 = vset.pattern.permute.xlu0 2
  %549 = vperm.xlu0 %548, %v256
  %v550 = vpop.permute.xlu0 %549
  %552 = vset.pattern.permute.xlu0 2
  %553 = vperm.xlu0 %552, %v257
  %v554 = vpop.permute.xlu0 %553
  %556 = vset.pattern.permute.xlu0 2
  %557 = vperm.xlu0 %556, %v258
  %v558 = vpop.permute.xlu0 %557
  %v560 = vsub.f32 %v540, %v546
  %v561 = vsub.f32 %v541, %v550
  %v562 = vsub.f32 %v542, %v554
  %v563 = vsub.f32 %v543, %v558
  %v564 = vadd.f32 %v560, %v283
  %v565 = vadd.f32 %v561, %v284
  %v566 = vadd.f32 %v562, %v285
  %v567 = vadd.f32 %v563, %v286
  %v568 = vmul.f32 %v564, 1.442695
  %v569 = vpow.pop %v568
  %v570 = vmul.f32 %v565, 1.442695
  %v571 = vpow.pop %v570
  %v572 = vmul.f32 %v566, 1.442695
  %v573 = vpow.pop %v572
  %v574 = vmul.f32 %v567, 1.442695
  %v575 = vpow.pop %v574
  %v576 = vpack.c.bf16 %v571, %v569
  %v577 = vpack.c.bf16 %v575, %v573
  %v579 = vsel %vm65, %v576, 0
  %v582 = vsel %vm65, %v577, 0
  %584 = vmatpush.bf16.msra.mxu0 0
  %585 = vmatpush.bf16.msra.mxu0 0
  %586 = vmatpush.bf16.msra.mxu0 0
  %587 = vmatpush.bf16.msra.mxu0 0
  %588 = vmatpush.bf16.msra.mxu0 0
  %589 = vmatpush.bf16.msra.mxu0 0
  %590 = vmatpush.bf16.msra.mxu0 %v513
  %591 = vmatpush.bf16.msra.mxu0 %v510
  %592 = vmatmul.bf16.gmra.mxu0 %v579
  %v593 = vpop.f32.mrf.mxu0
  %v594 = vadd.f32 0.0, %v593
  %v595 = vpop.f32.mrf.mxu0
  %v596 = vadd.f32 0.0, %v595
  %597 = vmatmul.bf16.gmra.mxu0 %v582
  %v598 = vpop.f32.mrf.mxu0
  %v599 = vadd.f32 0.0, %v598
  %v600 = vpop.f32.mrf.mxu0
  %v601 = vadd.f32 0.0, %v600
  %602 = vdwg.mxu0
  %v603 = vrcp.pop %v594
  %v604 = vrcp.pop %v596
  %v605 = vrcp.pop %v599
  %v606 = vrcp.pop %v601
  %608 = vset.pattern.permute.xlu0 8
  %609 = vperm.xlu0 %608, %v603
  %v610 = vpop.permute.xlu0 %609
  %613 = vset.pattern.permute.xlu0 8
  %614 = vperm.xlu0 %613, %v604
  %v615 = vpop.permute.xlu0 %614
  %618 = vset.pattern.permute.xlu0 8
  %619 = vperm.xlu0 %618, %v605
  %v620 = vpop.permute.xlu0 %619
  %623 = vset.pattern.permute.xlu0 8
  %624 = vperm.xlu0 %623, %v606
  %v625 = vpop.permute.xlu0 %624
  %v627 = vmul.f32 %v594, %v610
  %v628 = vmul.f32 %v596, %v615
  %v629 = vmul.f32 %v599, %v620
  %v630 = vmul.f32 %v601, %v625
  %635 = vrot.lane.b32.xlu0 %v627, 16
  %v636 = vpop.permute.xlu0 %635
  %637 = vrot.lane.b32.xlu0 %v628, 16
  %v638 = vpop.permute.xlu0 %637
  %639 = vrot.lane.b32.xlu0 %v629, 16
  %v640 = vpop.permute.xlu0 %639
  %641 = vrot.lane.b32.xlu0 %v630, 16
  %v642 = vpop.permute.xlu0 %641
  %vm647 = vcmask 195712
  %648 = vst.msk [vmem:[#allocation2] sm:$0xff] %vm647, %v636
  %649 = vst.msk [vmem:[#allocation2 + $0x8] sm:$0xff] %vm647, %v638
  %650 = vst.msk [vmem:[#allocation2 + $0x10] sm:$0xff] %vm647, %v640
  %651 = vst.msk [vmem:[#allocation2 + $0x18] sm:$0xff] %vm647, %v642
  %652 = vrot.lane.b32.xlu0 %v107, 104
  %v653 = vpop.permute.xlu0 %652
  %654 = vrot.lane.b32.xlu0 %v108, 104
  %v655 = vpop.permute.xlu0 %654
  %v657 = vsel %vm208, %v653, 1065369472
  %v660 = vsel %vm208, %v655, 1065369472
  %662 = vset.pattern.permute.xlu0 3
  %663 = vperm.xlu0 %662, %v137
  %v664 = vpop.permute.xlu0 %663
  %666 = vset.pattern.permute.xlu0 3
  %667 = vperm.xlu0 %666, %v139
  %v668 = vpop.permute.xlu0 %667
  %670 = vset.pattern.permute.xlu0 3
  %671 = vperm.xlu0 %670, %v142
  %v672 = vpop.permute.xlu0 %671
  %674 = vset.pattern.permute.xlu0 3
  %675 = vperm.xlu0 %674, %v144
  %v676 = vpop.permute.xlu0 %675
  %v678 = vperm.slane %v178, 3
  %v679 = vadd.f32 %v664, %v678
  %v680 = vadd.f32 %v668, %v678
  %v681 = vadd.f32 %v672, %v678
  %v682 = vadd.f32 %v676, %v678
  %v683 = vmul.f32 %v679, 0.2
  %v684 = vmul.f32 %v680, 0.2
  %v685 = vmul.f32 %v681, 0.2
  %v686 = vmul.f32 %v682, 0.2
  %v687 = vmax.f32 %v679, %v683
  %v688 = vmax.f32 %v680, %v684
  %v689 = vmax.f32 %v681, %v685
  %v690 = vmax.f32 %v682, %v686
  %691 = vset.pattern.permute.xlu0 3
  %692 = vperm.xlu0 %691, %v255
  %v693 = vpop.permute.xlu0 %692
  %695 = vset.pattern.permute.xlu0 3
  %696 = vperm.xlu0 %695, %v256
  %v697 = vpop.permute.xlu0 %696
  %699 = vset.pattern.permute.xlu0 3
  %700 = vperm.xlu0 %699, %v257
  %v701 = vpop.permute.xlu0 %700
  %703 = vset.pattern.permute.xlu0 3
  %704 = vperm.xlu0 %703, %v258
  %v705 = vpop.permute.xlu0 %704
  %v707 = vsub.f32 %v687, %v693
  %v708 = vsub.f32 %v688, %v697
  %v709 = vsub.f32 %v689, %v701
  %v710 = vsub.f32 %v690, %v705
  %v711 = vadd.f32 %v707, %v283
  %v712 = vadd.f32 %v708, %v284
  %v713 = vadd.f32 %v709, %v285
  %v714 = vadd.f32 %v710, %v286
  %v715 = vmul.f32 %v711, 1.442695
  %v716 = vpow.pop %v715
  %v717 = vmul.f32 %v712, 1.442695
  %v718 = vpow.pop %v717
  %v719 = vmul.f32 %v713, 1.442695
  %v720 = vpow.pop %v719
  %v721 = vmul.f32 %v714, 1.442695
  %v722 = vpow.pop %v721
  %v723 = vpack.c.bf16 %v718, %v716
  %v724 = vpack.c.bf16 %v722, %v720
  %v726 = vsel %vm65, %v723, 0
  %v729 = vsel %vm65, %v724, 0
  %731 = vmatpush.bf16.msra.mxu0 0
  %732 = vmatpush.bf16.msra.mxu0 0
  %733 = vmatpush.bf16.msra.mxu0 0
  %734 = vmatpush.bf16.msra.mxu0 0
  %735 = vmatpush.bf16.msra.mxu0 0
  %736 = vmatpush.bf16.msra.mxu0 0
  %737 = vmatpush.bf16.msra.mxu0 %v660
  %738 = vmatpush.bf16.msra.mxu0 %v657
  %739 = vmatmul.bf16.gmra.mxu0 %v726
  %v740 = vpop.f32.mrf.mxu0
  %v741 = vadd.f32 0.0, %v740
  %v742 = vpop.f32.mrf.mxu0
  %v743 = vadd.f32 0.0, %v742
  %744 = vmatmul.bf16.gmra.mxu0 %v729
  %v745 = vpop.f32.mrf.mxu0
  %v746 = vadd.f32 0.0, %v745
  %v747 = vpop.f32.mrf.mxu0
  %v748 = vadd.f32 0.0, %v747
  %749 = vdwg.mxu0
  %v750 = vrcp.pop %v741
  %v751 = vrcp.pop %v743
  %v752 = vrcp.pop %v746
  %v753 = vrcp.pop %v748
  %755 = vset.pattern.permute.xlu0 8
  %756 = vperm.xlu0 %755, %v750
  %v757 = vpop.permute.xlu0 %756
  %760 = vset.pattern.permute.xlu0 8
  %761 = vperm.xlu0 %760, %v751
  %v762 = vpop.permute.xlu0 %761
  %765 = vset.pattern.permute.xlu0 8
  %766 = vperm.xlu0 %765, %v752
  %v767 = vpop.permute.xlu0 %766
  %770 = vset.pattern.permute.xlu0 8
  %771 = vperm.xlu0 %770, %v753
  %v772 = vpop.permute.xlu0 %771
  %v774 = vmul.f32 %v741, %v757
  %v775 = vmul.f32 %v743, %v762
  %v776 = vmul.f32 %v746, %v767
  %v777 = vmul.f32 %v748, %v772
  %782 = vrot.lane.b32.xlu0 %v774, 24
  %v783 = vpop.permute.xlu0 %782
  %784 = vrot.lane.b32.xlu0 %v775, 24
  %v785 = vpop.permute.xlu0 %784
  %786 = vrot.lane.b32.xlu0 %v776, 24
  %v787 = vpop.permute.xlu0 %786
  %788 = vrot.lane.b32.xlu0 %v777, 24
  %v789 = vpop.permute.xlu0 %788
  %vm794 = vcmask 261312
  %795 = vst.msk [vmem:[#allocation2] sm:$0xff] %vm794, %v783
  %796 = vst.msk [vmem:[#allocation2 + $0x8] sm:$0xff] %vm794, %v785
  %797 = vst.msk [vmem:[#allocation2 + $0x10] sm:$0xff] %vm794, %v787
  %798 = vst.msk [vmem:[#allocation2 + $0x18] sm:$0xff] %vm794, %v789
  %v799 = vld [vmem:[#allocation2] sm:$0xff]
  %v800 = vld [vmem:[#allocation2 + $0x8] sm:$0xff]
  %v801 = vld [vmem:[#allocation2 + $0x10] sm:$0xff]
  %v802 = vld [vmem:[#allocation2 + $0x18] sm:$0xff]
  %v803 = vld [vmem:[%s3] sm:$0x1]
  %v805 = vperm.slane %v803, 0
  %v807 = vadd.f32 %v799, %v805
  %v808 = vadd.f32 %v800, %v805
  %v809 = vadd.f32 %v801, %v805
  %v810 = vadd.f32 %v802, %v805
  %v811 = vmax.f32 %v807, 0.0
  %v812 = vmax.f32 %v808, 0.0
  %v813 = vmax.f32 %v809, 0.0
  %v814 = vmax.f32 %v810, 0.0
  %v815 = vpack.c.bf16 %v812, %v811
  %v816 = vpack.c.bf16 %v814, %v813
  %v817 = vld [vmem:[%s4] sm:$0xf]
  %v818 = vld [vmem:[%s4 + $0x4] sm:$0xf]
  %v819 = vld [vmem:[%s4 + $0x8] sm:$0xf]
  %v820 = vld [vmem:[%s4 + $0xc] sm:$0xf]
  %v825 = vunpack.c.l.b16 %v817
  %v826 = vunpack.c.l.b16 %v818
  %v827 = vunpack.c.l.b16 %v819
  %v828 = vunpack.c.l.b16 %v820
  %v829 = vpack.c.b16 %v826, %v825
  %v830 = vpack.c.b16 %v828, %v827
  %v834 = vsel %vm65, %v815, 0
  %v837 = vsel %vm65, %v816, 0
  %839 = vmatpush.bf16.msra.mxu0 0
  %840 = vmatpush.bf16.msra.mxu0 0
  %841 = vmatpush.bf16.msra.mxu0 0
  %842 = vmatpush.bf16.msra.mxu0 0
  %843 = vmatpush.bf16.msra.mxu0 0
  %844 = vmatpush.bf16.msra.mxu0 0
  %845 = vmatpush.bf16.msra.mxu0 %v830
  %846 = vmatpush.bf16.msra.mxu0 %v829
  %847 = vmatmul.bf16.gmra.mxu0 %v834
  %v848 = vpop.f32.mrf.mxu0
  %v849 = vadd.f32 0.0, %v848
  %v850 = vpop.f32.mrf.mxu0
  %v851 = vadd.f32 0.0, %v850
  %852 = vmatmul.bf16.gmra.mxu0 %v837
  %v853 = vpop.f32.mrf.mxu0
  %v854 = vadd.f32 0.0, %v853
  %v855 = vpop.f32.mrf.mxu0
  %v856 = vadd.f32 0.0, %v855
  %857 = vdwg.mxu0
  %v858 = vlaneseq
  %v859 = vand.u32 %v858, 127
  %vm860 = vcmp.eq.s32.totalorder %v859, 4
  %v861 = vsel %vm860, 1.0, %v849
  %v862 = vsel %vm860, 1.0, %v851
  %v863 = vsel %vm860, 1.0, %v854
  %v864 = vsel %vm860, 1.0, %v856
  %v865 = vpack.c.bf16 %v862, %v861
  %v866 = vpack.c.bf16 %v864, %v863
  %v867 = vld [vmem:[%s5] sm:$0xf]
  %v868 = vld [vmem:[%s5 + $0x4] sm:$0xf]
  %v869 = vld [vmem:[%s5 + $0x8] sm:$0xf]
  %v870 = vld [vmem:[%s5 + $0xc] sm:$0xf]
  %v871 = vld [vmem:[%s5 + $0x10] sm:$0xf]
  %v872 = vld [vmem:[%s5 + $0x14] sm:$0xf]
  %v873 = vld [vmem:[%s5 + $0x18] sm:$0xf]
  %v874 = vld [vmem:[%s5 + $0x1c] sm:$0xf]
  %v875 = vld [vmem:[%s5 + $0x20] sm:$0xf]
  %v876 = vld [vmem:[%s5 + $0x24] sm:$0xf]
  %v877 = vld [vmem:[%s5 + $0x28] sm:$0xf]
  %v878 = vld [vmem:[%s5 + $0x2c] sm:$0xf]
  %v879 = vld [vmem:[%s5 + $0x30] sm:$0xf]
  %v880 = vld [vmem:[%s5 + $0x34] sm:$0xf]
  %v881 = vld [vmem:[%s5 + $0x38] sm:$0xf]
  %v882 = vld [vmem:[%s5 + $0x3c] sm:$0xf]
  %v899 = vunpack.c.l.b16 %v867
  %v900 = vunpack.c.l.b16 %v868
  %v901 = vunpack.c.l.b16 %v869
  %v902 = vunpack.c.l.b16 %v870
  %v903 = vunpack.c.l.b16 %v871
  %v904 = vunpack.c.l.b16 %v872
  %v905 = vunpack.c.l.b16 %v873
  %v906 = vunpack.c.l.b16 %v874
  %v907 = vunpack.c.l.b16 %v875
  %v908 = vunpack.c.l.b16 %v876
  %v909 = vunpack.c.l.b16 %v877
  %v910 = vunpack.c.l.b16 %v878
  %v911 = vunpack.c.l.b16 %v879
  %v912 = vunpack.c.l.b16 %v880
  %v913 = vunpack.c.l.b16 %v881
  %v914 = vunpack.c.l.b16 %v882
  %v915 = vpack.c.b16 %v900, %v899
  %v916 = vpack.c.b16 %v902, %v901
  %v917 = vpack.c.b16 %v904, %v903
  %v918 = vpack.c.b16 %v906, %v905
  %v919 = vpack.c.b16 %v908, %v907
  %v920 = vpack.c.b16 %v910, %v909
  %v921 = vpack.c.b16 %v912, %v911
  %v922 = vpack.c.b16 %v914, %v913
  %931 = vmatpush.bf16.msra.mxu0 %v922
  %932 = vmatpush.bf16.msra.mxu0 %v921
  %933 = vmatpush.bf16.msra.mxu0 %v920
  %934 = vmatpush.bf16.msra.mxu0 %v919
  %935 = vmatpush.bf16.msra.mxu0 %v918
  %936 = vmatpush.bf16.msra.mxu0 %v917
  %937 = vmatpush.bf16.msra.mxu0 %v916
  %938 = vmatpush.bf16.msra.mxu0 %v915
  %939 = vmatmul.bf16.gmra.mxu0 %v865
  %v940 = vpop.f32.mrf.mxu0
  %v941 = vadd.f32 0.0, %v940
  %v942 = vpop.f32.mrf.mxu0
  %v943 = vadd.f32 0.0, %v942
  %944 = vmatmul.bf16.gmra.mxu0 %v866
  %v945 = vpop.f32.mrf.mxu0
  %v946 = vadd.f32 0.0, %v945
  %v947 = vpop.f32.mrf.mxu0
  %v948 = vadd.f32 0.0, %v947
  %949 = vdwg.mxu0
  %vm950 = vcmask 15368
  %v951 = vsel %vm950, %v941, -inf
  %v952 = vsel %vm950, %v943, -inf
  %v953 = vsel %vm950, %v946, -inf
  %v954 = vsel %vm950, %v948, -inf
  %v955 = vmax.f32 %v951, %v952
  %v956 = vmax.f32 %v953, %v954
  %v957 = vmax.f32 %v955, %v956
  %v958 = vrot.slane %v957, 4
  %v959 = vmax.f32 %v957, %v958
  %v960 = vrot.slane %v959, 2
  %v961 = vmax.f32 %v959, %v960
  %v962 = vrot.slane %v961, 1
  %v963 = vmax.f32 %v961, %v962
  %968 = vrot.lane.b32.xlu0 %v941, 127
  %v969 = vpop.permute.xlu0 %968
  %970 = vrot.lane.b32.xlu0 %v943, 127
  %v971 = vpop.permute.xlu0 %970
  %972 = vrot.lane.b32.xlu0 %v946, 127
  %v973 = vpop.permute.xlu0 %972
  %974 = vrot.lane.b32.xlu0 %v948, 127
  %v975 = vpop.permute.xlu0 %974
  %980 = vxpose.xlu0.b32.start [1/16] %v969, 128
  %981 = vxpose.xlu0.b32.cont [2/16] %v971, 128
  %982 = vxpose.xlu0.b32.cont [3/16] %v973, 128
  %983 = vxpose.xlu0.b32.cont [4/16] %v975, 128
  %984 = vxpose.xlu0.b32.cont [5/16] 0.0, 128
  %985 = vxpose.xlu0.b32.cont [6/16] 0.0, 128
  %986 = vxpose.xlu0.b32.cont [7/16] 0.0, 128
  %987 = vxpose.xlu0.b32.cont [8/16] 0.0, 128
  %988 = vxpose.xlu0.b32.cont [9/16] 0.0, 128
  %989 = vxpose.xlu0.b32.cont [10/16] 0.0, 128
  %990 = vxpose.xlu0.b32.cont [11/16] 0.0, 128
  %991 = vxpose.xlu0.b32.cont [12/16] 0.0, 128
  %992 = vxpose.xlu0.b32.cont [13/16] 0.0, 128
  %993 = vxpose.xlu0.b32.cont [14/16] 0.0, 128
  %994 = vxpose.xlu0.b32.cont [15/16] 0.0, 128
  %995 = vxpose.xlu0.b32.end [16/16] 0.0, 128
  %v996 = vpop.trf.xlu0
  %v997 = vpop.trf.xlu0
  %v998 = vpop.trf.xlu0
  %v999 = vpop.trf.xlu0
  %v1000 = vpop.trf.xlu0
  %v1001 = vpop.trf.xlu0
  %v1002 = vpop.trf.xlu0
  %v1003 = vpop.trf.xlu0
  %v1004 = vpop.trf.xlu0
  %v1005 = vpop.trf.xlu0
  %v1006 = vpop.trf.xlu0
  %v1007 = vpop.trf.xlu0
  %v1008 = vpop.trf.xlu0
  %v1009 = vpop.trf.xlu0
  %v1010 = vpop.trf.xlu0
  %v1011 = vpop.trf.xlu0
  %1012 = vset.pattern.permute.xlu0 0
  %1013 = vperm.xlu0 %1012, %v941
  %v1014 = vpop.permute.xlu0 %1013
  %1016 = vset.pattern.permute.xlu0 0
  %1017 = vperm.xlu0 %1016, %v943
  %v1018 = vpop.permute.xlu0 %1017
  %1020 = vset.pattern.permute.xlu0 0
  %1021 = vperm.xlu0 %1020, %v946
  %v1022 = vpop.permute.xlu0 %1021
  %1024 = vset.pattern.permute.xlu0 0
  %1025 = vperm.xlu0 %1024, %v948
  %v1026 = vpop.permute.xlu0 %1025
  %v1028 = vperm.slane %v996, 0
  %v1029 = vadd.f32 %v1014, %v1028
  %v1030 = vadd.f32 %v1018, %v1028
  %v1031 = vadd.f32 %v1022, %v1028
  %v1032 = vadd.f32 %v1026, %v1028
  %v1033 = vmul.f32 %v1029, 0.2
  %v1034 = vmul.f32 %v1030, 0.2
  %v1035 = vmul.f32 %v1031, 0.2
  %v1036 = vmul.f32 %v1032, 0.2
  %v1037 = vmax.f32 %v1029, %v1033
  %v1038 = vmax.f32 %v1030, %v1034
  %v1039 = vmax.f32 %v1031, %v1035
  %v1040 = vmax.f32 %v1032, %v1036
  %1042 = vrot.lane.b32.xlu0 %v963, 127
  %v1043 = vpop.permute.xlu0 %1042
  %v1045 = vadd.f32 %v941, %v1043
  %v1046 = vadd.f32 %v943, %v1043
  %v1047 = vadd.f32 %v946, %v1043
  %v1048 = vadd.f32 %v948, %v1043
  %v1049 = vmul.f32 %v1045, 0.2
  %v1050 = vmul.f32 %v1046, 0.2
  %v1051 = vmul.f32 %v1047, 0.2
  %v1052 = vmul.f32 %v1048, 0.2
  %v1053 = vmax.f32 %v1045, %v1049
  %v1054 = vmax.f32 %v1046, %v1050
  %v1055 = vmax.f32 %v1047, %v1051
  %v1056 = vmax.f32 %v1048, %v1052
  %1058 = vset.pattern.permute.xlu0 0
  %1059 = vperm.xlu0 %1058, %v1053
  %v1060 = vpop.permute.xlu0 %1059
  %1063 = vset.pattern.permute.xlu0 0
  %1064 = vperm.xlu0 %1063, %v1054
  %v1065 = vpop.permute.xlu0 %1064
  %1068 = vset.pattern.permute.xlu0 0
  %1069 = vperm.xlu0 %1068, %v1055
  %v1070 = vpop.permute.xlu0 %1069
  %1073 = vset.pattern.permute.xlu0 0
  %1074 = vperm.xlu0 %1073, %v1056
  %v1075 = vpop.permute.xlu0 %1074
  %v1077 = vsub.f32 %v1037, %v1060
  %v1078 = vsub.f32 %v1038, %v1065
  %v1079 = vsub.f32 %v1039, %v1070
  %v1080 = vsub.f32 %v1040, %v1075
  %v1081 = vadd.f32 %v1077, %v283
  %v1082 = vadd.f32 %v1078, %v284
  %v1083 = vadd.f32 %v1079, %v285
  %v1084 = vadd.f32 %v1080, %v286
  %v1085 = vmul.f32 %v1081, 1.442695
  %v1086 = vpow.pop %v1085
  %v1087 = vmul.f32 %v1082, 1.442695
  %v1088 = vpow.pop %v1087
  %v1089 = vmul.f32 %v1083, 1.442695
  %v1090 = vpow.pop %v1089
  %v1091 = vmul.f32 %v1084, 1.442695
  %v1092 = vpow.pop %v1091
  %v1093 = vpack.c.bf16 %v1088, %v1086
  %v1094 = vpack.c.bf16 %v1092, %v1090
  %v1096 = vsel %vm65, %v1093, 0
  %v1099 = vsel %vm65, %v1094, 0
  %1101 = vmatpush.bf16.msra.mxu0 0
  %1102 = vmatpush.bf16.msra.mxu0 0
  %1103 = vmatpush.bf16.msra.mxu0 0
  %1104 = vmatpush.bf16.msra.mxu0 0
  %1105 = vmatpush.bf16.msra.mxu0 0
  %1106 = vmatpush.bf16.msra.mxu0 0
  %1107 = vmatpush.bf16.msra.mxu0 %v866
  %1108 = vmatpush.bf16.msra.mxu0 %v865
  %1109 = vmatmul.bf16.gmra.mxu0 %v1096
  %v1110 = vpop.f32.mrf.mxu0
  %v1111 = vadd.f32 0.0, %v1110
  %v1112 = vpop.f32.mrf.mxu0
  %v1113 = vadd.f32 0.0, %v1112
  %1114 = vmatmul.bf16.gmra.mxu0 %v1099
  %v1115 = vpop.f32.mrf.mxu0
  %v1116 = vadd.f32 0.0, %v1115
  %v1117 = vpop.f32.mrf.mxu0
  %v1118 = vadd.f32 0.0, %v1117
  %1119 = vdwg.mxu0
  %v1120 = vrcp.pop %v1111
  %v1121 = vrcp.pop %v1113
  %v1122 = vrcp.pop %v1116
  %v1123 = vrcp.pop %v1118
  %1125 = vset.pattern.permute.xlu0 4
  %1126 = vperm.xlu0 %1125, %v1120
  %v1127 = vpop.permute.xlu0 %1126
  %1130 = vset.pattern.permute.xlu0 4
  %1131 = vperm.xlu0 %1130, %v1121
  %v1132 = vpop.permute.xlu0 %1131
  %1135 = vset.pattern.permute.xlu0 4
  %1136 = vperm.xlu0 %1135, %v1122
  %v1137 = vpop.permute.xlu0 %1136
  %1140 = vset.pattern.permute.xlu0 4
  %1141 = vperm.xlu0 %1140, %v1123
  %v1142 = vpop.permute.xlu0 %1141
  %v1144 = vmul.f32 %v1111, %v1127
  %v1145 = vmul.f32 %v1113, %v1132
  %v1146 = vmul.f32 %v1116, %v1137
  %v1147 = vmul.f32 %v1118, %v1142
  %v1148 = vld [vmem:[%s6] sm:$0x1]
  %v1150 = vperm.slane %v1148, 0
  %v1152 = vadd.f32 %v1144, %v1150
  %v1153 = vadd.f32 %v1145, %v1150
  %v1154 = vadd.f32 %v1146, %v1150
  %v1155 = vadd.f32 %v1147, %v1150
  %1156 = vst [vmem:[%s8] sm:$0xff] %v1152
  %1157 = vst [vmem:[%s8 + $0x8] sm:$0xff] %v1153
  %1158 = vst [vmem:[%s8 + $0x10] sm:$0xff] %v1154
  %1159 = vst [vmem:[%s8 + $0x18] sm:$0xff] %v1155
  // Predicated region
  $region34: #{gat_model_forward.1} parent=0 // pred_check
    _
  $region35: #{gat_model_forward.1} parent=0 // pred_check_branch
    %1161 = sbr.rel (0) target = $region37
  $region36: #{gat_model_forward.1} parent=0 // pred_region
    _
  $region37: #{gat_model_forward.1} parent=0 // pred_fallthru
    _
  // Predicated region
  $region38: #{gat_model_forward.1} parent=0 // pred_check
    _
  $region39: #{gat_model_forward.1} parent=0 // pred_check_branch
    %1163 = sbr.rel (0) target = $region41
  $region40: #{gat_model_forward.1} parent=0 // pred_region
    _
  $region41: #{gat_model_forward.1} parent=0 // pred_fallthru
    _

</llo_original>
